<compile_context>
chip_gen: v7x
topology: tpu7x:2x2x1
jax: 0.10.0
libtpu: 0.0.40
codegen_flags: <defaults>
</compile_context>

<pallas_src>
import functools

import jax
import jax.numpy as jnp
from jax.experimental import pallas as pl
from jax.experimental.pallas import tpu as pltpu


def _shift_lanes(x, d, length):
    """result[:, i] = x[:, i + d] if 0 <= i + d < length else 0 (static d)."""
    if d == 0:
        return x
    rows = x.shape[0]
    z = jnp.zeros((rows, abs(d)), x.dtype)
    if d > 0:
        return jnp.concatenate([x[:, d:], z], axis=1)
    return jnp.concatenate([z, x[:, :length + d]], axis=1)


def _make_basic_block_kernel(C, H, W):
    HW = H * W

    def conv3x3_taps(xc, mask_l, mask_r):
        # xc: (C, HW).  Build the (9*C, HW) "im2col" stack so the 3x3 conv is
        # a single K = 9*C MXU matmul.  Row order: (kh, kw, ci), matching the
        # host-side weight folding.
        taps = []
        for kh in range(3):
            dh = kh - 1
            for kw in range(3):
                dw = kw - 1
                t = _shift_lanes(xc, dh * W + dw, HW)
                if dw == -1:
                    t = t * mask_l          # zero where w-1 < 0
                elif dw == 1:
                    t = t * mask_r          # zero where w+1 > W-1
                taps.append(t)
        return jnp.concatenate(taps, axis=0)

    def kernel(x_ref, w1_ref, s1_ref, b1_ref, w2_ref, s2_ref, b2_ref,
               ml_ref, mr_ref, o_ref):
        x0 = x_ref[...]                      # (C, HW), lane-dense
        ml = ml_ref[...]
        mr = mr_ref[...]
        # conv1 + folded BN1 + ReLU  (one MXU matmul)
        p1 = conv3x3_taps(x0, ml, mr)        # (9C, HW)
        y1 = jnp.dot(w1_ref[...], p1, preferred_element_type=jnp.float32)
        y1 = jnp.maximum(y1 * s1_ref[...] + b1_ref[...], 0.0)
        # conv2 + folded BN2  (one MXU matmul)
        p2 = conv3x3_taps(y1, ml, mr)
        y2 = jnp.dot(w2_ref[...], p2, preferred_element_type=jnp.float32)
        y2 = y2 * s2_ref[...] + b2_ref[...]
        # residual add + final ReLU, single full-tile unmasked store
        o_ref[...] = jnp.maximum(y2 + x0, 0.0).astype(o_ref.dtype)

    return kernel


@functools.partial(jax.jit, static_argnames=("H", "W"))
def basic_block_forward(x_nchw, params, *, H, W):
    """x_nchw: (N, C, H, W) f32 -> (N, C, H, W) f32 (PyTorch layout in/out)."""
    N, C, _, _ = x_nchw.shape
    HW = H * W
    x = x_nchw.reshape(N, C, HW)              # contiguous reshape (free)

    # Edge-validity masks for the lane-shifted taps (constants, DMA'd once).
    w_pos = jnp.tile(jnp.arange(W, dtype=jnp.int32), H)[None, :]      # (1, HW)
    mask_l = jnp.broadcast_to((w_pos >= 1).astype(jnp.float32), (C, HW))
    mask_r = jnp.broadcast_to((w_pos <= W - 2).astype(jnp.float32), (C, HW))

    kernel = _make_basic_block_kernel(C, H, W)
    const = lambda n: (0, 0)
    out = pl.pallas_call(
        kernel,
        out_shape=jax.ShapeDtypeStruct((N, C, HW), jnp.float32),
        grid=(N,),
        in_specs=[
            pl.BlockSpec((None, C, HW), lambda n: (n, 0, 0)),   # x (per image)
            pl.BlockSpec((C, 9 * C), const),                    # w1 (Cout, 9Cin)
            pl.BlockSpec((C, 1), const),                        # bn1 scale
            pl.BlockSpec((C, 1), const),                        # bn1 bias
            pl.BlockSpec((C, 9 * C), const),                    # w2
            pl.BlockSpec((C, 1), const),                        # bn2 scale
            pl.BlockSpec((C, 1), const),                        # bn2 bias
            pl.BlockSpec((C, HW), const),                       # left-edge mask
            pl.BlockSpec((C, HW), const),                       # right-edge mask
        ],
        out_specs=pl.BlockSpec((None, C, HW), lambda n: (n, 0, 0)),
        compiler_params=pltpu.CompilerParams(
            dimension_semantics=("parallel",)),
    )(x, params["w1"], params["s1"], params["b1"],
      params["w2"], params["s2"], params["b2"], mask_l, mask_r)
    return out.reshape(N, C, H, W)


# ----------------------------------------------------------------------------
# Host-side parameter prep (PyTorch-layout -> kernel-layout folding)
# ----------------------------------------------------------------------------
def fold_conv_weight(w_oihw):
    # PyTorch OIHW (Cout, Cin, 3, 3) -> (Cout, 9*Cin), row order (kh, kw, ci)
    # matching the tap stacking order inside the kernel.
    Cout, Cin, KH, KW = w_oihw.shape
    return jnp.transpose(w_oihw, (0, 2, 3, 1)).reshape(Cout, KH * KW * Cin)


def fold_bn(gamma, beta, mean, var, eps=1e-5):
    scale = gamma / jnp.sqrt(var + eps)
    bias = beta - mean * scale
    return scale.reshape(-1, 1), bias.reshape(-1, 1)


def init_params(key, C):
    ks = jax.random.split(key, 4)
    w1 = 0.1 * jax.random.normal(ks[0], (C, C, 3, 3), jnp.float32)  # OIHW, no bias
    w2 = 0.1 * jax.random.normal(ks[1], (C, C, 3, 3), jnp.float32)

    def bn(k):
        k1, k2, k3, k4 = jax.random.split(k, 4)
        gamma = 1.0 + 0.1 * jax.random.normal(k1, (C,), jnp.float32)
        beta = 0.1 * jax.random.normal(k2, (C,), jnp.float32)
        mean = 0.1 * jax.random.normal(k3, (C,), jnp.float32)
        var = 1.0 + 0.1 * jnp.abs(jax.random.normal(k4, (C,), jnp.float32))
        return gamma, beta, mean, var

    bn1, bn2 = bn(ks[2]), bn(ks[3])
    s1, b1 = fold_bn(*bn1)
    s2, b2 = fold_bn(*bn2)
    raw = dict(w1=w1, w2=w2, bn1=bn1, bn2=bn2)
    folded = dict(w1=fold_conv_weight(w1), s1=s1, b1=b1,
                  w2=fold_conv_weight(w2), s2=s2, b2=b2)
    return raw, folded


# ----------------------------------------------------------------------------
# Pure-JAX reference (eval-mode BasicBlock; tfa(x) is dead code -> omitted)
# ----------------------------------------------------------------------------
def reference_forward(x, raw, eps=1e-5):
    def conv(inp, w):
        return jax.lax.conv_general_dilated(
            inp, w, window_strides=(1, 1), padding=((1, 1), (1, 1)),
            dimension_numbers=("NCHW", "OIHW", "NCHW"),
            precision=jax.lax.Precision.HIGHEST)

    def bn(y, p):
        gamma, beta, mean, var = p
        inv = gamma / jnp.sqrt(var + eps)
        return ((y - mean[None, :, None, None]) * inv[None, :, None, None]
                + beta[None, :, None, None])

    out = jax.nn.relu(bn(conv(x, raw["w1"]), raw["bn1"]))
    out = bn(conv(out, raw["w2"]), raw["bn2"])
    return jax.nn.relu(out + x)


if __name__ == "__main__":
    key = jax.random.PRNGKey(0)
    kx, kp = jax.random.split(key)

    # Small shapes: batch=2, in_planes=planes=8, spatial 16x16 (stride=1).
    N, C, H, W = 2, 8, 16, 16
    x = jax.random.normal(kx, (N, C, H, W), jnp.float32)   # PyTorch NCHW layout
    raw, folded = init_params(kp, C)

    out = basic_block_forward(x, folded, H=H, W=W)
    out = jax.block_until_ready(out)

    # Correctness check against the pure-JAX reference (tolerance covers the
    # MXU default-precision f32 matmul path).
    ref = reference_forward(x, raw)
    err = float(jnp.max(jnp.abs(out - ref)))
    assert err < 5e-2, f"max abs err {err}"

    print("KERNEL_OK")
</pallas_src>

<mosaic_0001>
module attributes {stable_mosaic.version = 11 : i64} {
  func.func @kernel(%arg0: i32, %arg1: memref<1x8x256xf32, #tpu.memory_space<vmem>>, %arg2: memref<8x72xf32, #tpu.memory_space<vmem>>, %arg3: memref<8x1xf32, #tpu.memory_space<vmem>>, %arg4: memref<8x1xf32, #tpu.memory_space<vmem>>, %arg5: memref<8x72xf32, #tpu.memory_space<vmem>>, %arg6: memref<8x1xf32, #tpu.memory_space<vmem>>, %arg7: memref<8x1xf32, #tpu.memory_space<vmem>>, %arg8: memref<8x256xf32, #tpu.memory_space<vmem>>, %arg9: memref<8x256xf32, #tpu.memory_space<vmem>>, %arg10: memref<1x8x256xf32, #tpu.memory_space<vmem>>) attributes {dimension_semantics = [#tpu.dimension_semantics<parallel>], iteration_bounds = array<i64: 2>, scalar_prefetch = 0 : i64, scratch_operands = 0 : i64, tpu.core_type = #tpu.core_type<tc>, window_params = [{transform_indices = @transform_0, window_bounds = array<i64: 1, 8, 256>}, {pipeline_mode = #tpu.pipeline_mode<synchronous>, transform_indices = @transform_1, window_bounds = array<i64: 8, 72>}, {pipeline_mode = #tpu.pipeline_mode<synchronous>, transform_indices = @transform_2, window_bounds = array<i64: 8, 1>}, {pipeline_mode = #tpu.pipeline_mode<synchronous>, transform_indices = @transform_3, window_bounds = array<i64: 8, 1>}, {pipeline_mode = #tpu.pipeline_mode<synchronous>, transform_indices = @transform_4, window_bounds = array<i64: 8, 72>}, {pipeline_mode = #tpu.pipeline_mode<synchronous>, transform_indices = @transform_5, window_bounds = array<i64: 8, 1>}, {pipeline_mode = #tpu.pipeline_mode<synchronous>, transform_indices = @transform_6, window_bounds = array<i64: 8, 1>}, {pipeline_mode = #tpu.pipeline_mode<synchronous>, transform_indices = @transform_7, window_bounds = array<i64: 8, 256>}, {pipeline_mode = #tpu.pipeline_mode<synchronous>, transform_indices = @transform_8, window_bounds = array<i64: 8, 256>}, {transform_indices = @transform_9, window_bounds = array<i64: 1, 8, 256>}]} {
    %c0 = arith.constant 0 : index
    %c0_0 = arith.constant 0 : index
    %c0_1 = arith.constant 0 : index
    %0 = vector.load %arg1[%c0, %c0_0, %c0_1] : memref<1x8x256xf32, #tpu.memory_space<vmem>>, vector<1x8x256xf32>
    %1 = vector.shape_cast %0 : vector<1x8x256xf32> to vector<8x256xf32>
    %c0_2 = arith.constant 0 : index
    %c0_3 = arith.constant 0 : index
    %2 = vector.load %arg8[%c0_2, %c0_3] : memref<8x256xf32, #tpu.memory_space<vmem>>, vector<8x256xf32>
    %c0_4 = arith.constant 0 : index
    %c0_5 = arith.constant 0 : index
    %3 = vector.load %arg9[%c0_4, %c0_5] : memref<8x256xf32, #tpu.memory_space<vmem>>, vector<8x256xf32>
    %cst = arith.constant 0.000000e+00 : f32
    %4 = vector.broadcast %cst : f32 to vector<8x17xf32>
    %5 = vector.extract_strided_slice %1 {offsets = [0, 0], sizes = [8, 239], strides = [1, 1]} : vector<8x256xf32> to vector<8x239xf32>
    %6 = tpu.concatenate %4, %5 in 1 : vector<8x17xf32>, vector<8x239xf32> -> vector<8x256xf32>
    %7 = arith.mulf %6, %2 : vector<8x256xf32>
    %cst_6 = arith.constant 0.000000e+00 : f32
    %8 = vector.broadcast %cst_6 : f32 to vector<8x16xf32>
    %9 = vector.extract_strided_slice %1 {offsets = [0, 0], sizes = [8, 240], strides = [1, 1]} : vector<8x256xf32> to vector<8x240xf32>
    %10 = tpu.concatenate %8, %9 in 1 : vector<8x16xf32>, vector<8x240xf32> -> vector<8x256xf32>
    %cst_7 = arith.constant 0.000000e+00 : f32
    %11 = vector.broadcast %cst_7 : f32 to vector<8x15xf32>
    %12 = vector.extract_strided_slice %1 {offsets = [0, 0], sizes = [8, 241], strides = [1, 1]} : vector<8x256xf32> to vector<8x241xf32>
    %13 = tpu.concatenate %11, %12 in 1 : vector<8x15xf32>, vector<8x241xf32> -> vector<8x256xf32>
    %14 = arith.mulf %13, %3 : vector<8x256xf32>
    %cst_8 = arith.constant 0.000000e+00 : f32
    %15 = vector.broadcast %cst_8 : f32 to vector<8x1xf32>
    %16 = vector.extract_strided_slice %1 {offsets = [0, 0], sizes = [8, 255], strides = [1, 1]} : vector<8x256xf32> to vector<8x255xf32>
    %17 = tpu.concatenate %15, %16 in 1 : vector<8x1xf32>, vector<8x255xf32> -> vector<8x256xf32>
    %18 = arith.mulf %17, %2 : vector<8x256xf32>
    %cst_9 = arith.constant 0.000000e+00 : f32
    %19 = vector.broadcast %cst_9 : f32 to vector<8x1xf32>
    %20 = vector.extract_strided_slice %1 {offsets = [0, 1], sizes = [8, 255], strides = [1, 1]} : vector<8x256xf32> to vector<8x255xf32>
    %21 = tpu.concatenate %20, %19 in 1 : vector<8x255xf32>, vector<8x1xf32> -> vector<8x256xf32>
    %22 = arith.mulf %21, %3 : vector<8x256xf32>
    %cst_10 = arith.constant 0.000000e+00 : f32
    %23 = vector.broadcast %cst_10 : f32 to vector<8x15xf32>
    %24 = vector.extract_strided_slice %1 {offsets = [0, 15], sizes = [8, 241], strides = [1, 1]} : vector<8x256xf32> to vector<8x241xf32>
    %25 = tpu.concatenate %24, %23 in 1 : vector<8x241xf32>, vector<8x15xf32> -> vector<8x256xf32>
    %26 = arith.mulf %25, %2 : vector<8x256xf32>
    %cst_11 = arith.constant 0.000000e+00 : f32
    %27 = vector.broadcast %cst_11 : f32 to vector<8x16xf32>
    %28 = vector.extract_strided_slice %1 {offsets = [0, 16], sizes = [8, 240], strides = [1, 1]} : vector<8x256xf32> to vector<8x240xf32>
    %29 = tpu.concatenate %28, %27 in 1 : vector<8x240xf32>, vector<8x16xf32> -> vector<8x256xf32>
    %cst_12 = arith.constant 0.000000e+00 : f32
    %30 = vector.broadcast %cst_12 : f32 to vector<8x17xf32>
    %31 = vector.extract_strided_slice %1 {offsets = [0, 17], sizes = [8, 239], strides = [1, 1]} : vector<8x256xf32> to vector<8x239xf32>
    %32 = tpu.concatenate %31, %30 in 1 : vector<8x239xf32>, vector<8x17xf32> -> vector<8x256xf32>
    %33 = arith.mulf %32, %3 : vector<8x256xf32>
    %34 = tpu.concatenate %7, %10, %14, %18, %1, %22, %26, %29, %33 in 0 : vector<8x256xf32>, vector<8x256xf32>, vector<8x256xf32>, vector<8x256xf32>, vector<8x256xf32>, vector<8x256xf32>, vector<8x256xf32>, vector<8x256xf32>, vector<8x256xf32> -> vector<72x256xf32>
    %c0_13 = arith.constant 0 : index
    %c0_14 = arith.constant 0 : index
    %35 = vector.load %arg2[%c0_13, %c0_14] : memref<8x72xf32, #tpu.memory_space<vmem>>, vector<8x72xf32>
    %cst_15 = arith.constant dense<0.000000e+00> : vector<8x256xf32>
    %36 = tpu.matmul %35, %34, %cst_15 {dimension_numbers = #tpu.dot_dimension_numbers<[1], [0], [0], [1], [0, 0, 1, 1], [], []>} : vector<8x72xf32>, vector<72x256xf32>, vector<8x256xf32> -> vector<8x256xf32>
    %c0_16 = arith.constant 0 : index
    %c0_17 = arith.constant 0 : index
    %37 = vector.load %arg3[%c0_16, %c0_17] : memref<8x1xf32, #tpu.memory_space<vmem>>, vector<8x1xf32>
    %38 = vector.broadcast %37 : vector<8x1xf32> to vector<8x256xf32>
    %39 = arith.mulf %36, %38 : vector<8x256xf32>
    %c0_18 = arith.constant 0 : index
    %c0_19 = arith.constant 0 : index
    %40 = vector.load %arg4[%c0_18, %c0_19] : memref<8x1xf32, #tpu.memory_space<vmem>>, vector<8x1xf32>
    %41 = vector.broadcast %40 : vector<8x1xf32> to vector<8x256xf32>
    %42 = arith.addf %39, %41 : vector<8x256xf32>
    %cst_20 = arith.constant 0.000000e+00 : f32
    %43 = vector.broadcast %cst_20 : f32 to vector<8x256xf32>
    %44 = arith.maximumf %42, %43 : vector<8x256xf32>
    %cst_21 = arith.constant 0.000000e+00 : f32
    %45 = vector.broadcast %cst_21 : f32 to vector<8x17xf32>
    %46 = vector.extract_strided_slice %44 {offsets = [0, 0], sizes = [8, 239], strides = [1, 1]} : vector<8x256xf32> to vector<8x239xf32>
    %47 = tpu.concatenate %45, %46 in 1 : vector<8x17xf32>, vector<8x239xf32> -> vector<8x256xf32>
    %48 = arith.mulf %47, %2 : vector<8x256xf32>
    %cst_22 = arith.constant 0.000000e+00 : f32
    %49 = vector.broadcast %cst_22 : f32 to vector<8x16xf32>
    %50 = vector.extract_strided_slice %44 {offsets = [0, 0], sizes = [8, 240], strides = [1, 1]} : vector<8x256xf32> to vector<8x240xf32>
    %51 = tpu.concatenate %49, %50 in 1 : vector<8x16xf32>, vector<8x240xf32> -> vector<8x256xf32>
    %cst_23 = arith.constant 0.000000e+00 : f32
    %52 = vector.broadcast %cst_23 : f32 to vector<8x15xf32>
    %53 = vector.extract_strided_slice %44 {offsets = [0, 0], sizes = [8, 241], strides = [1, 1]} : vector<8x256xf32> to vector<8x241xf32>
    %54 = tpu.concatenate %52, %53 in 1 : vector<8x15xf32>, vector<8x241xf32> -> vector<8x256xf32>
    %55 = arith.mulf %54, %3 : vector<8x256xf32>
    %cst_24 = arith.constant 0.000000e+00 : f32
    %56 = vector.broadcast %cst_24 : f32 to vector<8x1xf32>
    %57 = vector.extract_strided_slice %44 {offsets = [0, 0], sizes = [8, 255], strides = [1, 1]} : vector<8x256xf32> to vector<8x255xf32>
    %58 = tpu.concatenate %56, %57 in 1 : vector<8x1xf32>, vector<8x255xf32> -> vector<8x256xf32>
    %59 = arith.mulf %58, %2 : vector<8x256xf32>
    %cst_25 = arith.constant 0.000000e+00 : f32
    %60 = vector.broadcast %cst_25 : f32 to vector<8x1xf32>
    %61 = vector.extract_strided_slice %44 {offsets = [0, 1], sizes = [8, 255], strides = [1, 1]} : vector<8x256xf32> to vector<8x255xf32>
    %62 = tpu.concatenate %61, %60 in 1 : vector<8x255xf32>, vector<8x1xf32> -> vector<8x256xf32>
    %63 = arith.mulf %62, %3 : vector<8x256xf32>
    %cst_26 = arith.constant 0.000000e+00 : f32
    %64 = vector.broadcast %cst_26 : f32 to vector<8x15xf32>
    %65 = vector.extract_strided_slice %44 {offsets = [0, 15], sizes = [8, 241], strides = [1, 1]} : vector<8x256xf32> to vector<8x241xf32>
    %66 = tpu.concatenate %65, %64 in 1 : vector<8x241xf32>, vector<8x15xf32> -> vector<8x256xf32>
    %67 = arith.mulf %66, %2 : vector<8x256xf32>
    %cst_27 = arith.constant 0.000000e+00 : f32
    %68 = vector.broadcast %cst_27 : f32 to vector<8x16xf32>
    %69 = vector.extract_strided_slice %44 {offsets = [0, 16], sizes = [8, 240], strides = [1, 1]} : vector<8x256xf32> to vector<8x240xf32>
    %70 = tpu.concatenate %69, %68 in 1 : vector<8x240xf32>, vector<8x16xf32> -> vector<8x256xf32>
    %cst_28 = arith.constant 0.000000e+00 : f32
    %71 = vector.broadcast %cst_28 : f32 to vector<8x17xf32>
    %72 = vector.extract_strided_slice %44 {offsets = [0, 17], sizes = [8, 239], strides = [1, 1]} : vector<8x256xf32> to vector<8x239xf32>
    %73 = tpu.concatenate %72, %71 in 1 : vector<8x239xf32>, vector<8x17xf32> -> vector<8x256xf32>
    %74 = arith.mulf %73, %3 : vector<8x256xf32>
    %75 = tpu.concatenate %48, %51, %55, %59, %44, %63, %67, %70, %74 in 0 : vector<8x256xf32>, vector<8x256xf32>, vector<8x256xf32>, vector<8x256xf32>, vector<8x256xf32>, vector<8x256xf32>, vector<8x256xf32>, vector<8x256xf32>, vector<8x256xf32> -> vector<72x256xf32>
    %c0_29 = arith.constant 0 : index
    %c0_30 = arith.constant 0 : index
    %76 = vector.load %arg5[%c0_29, %c0_30] : memref<8x72xf32, #tpu.memory_space<vmem>>, vector<8x72xf32>
    %cst_31 = arith.constant dense<0.000000e+00> : vector<8x256xf32>
    %77 = tpu.matmul %76, %75, %cst_31 {dimension_numbers = #tpu.dot_dimension_numbers<[1], [0], [0], [1], [0, 0, 1, 1], [], []>} : vector<8x72xf32>, vector<72x256xf32>, vector<8x256xf32> -> vector<8x256xf32>
    %c0_32 = arith.constant 0 : index
    %c0_33 = arith.constant 0 : index
    %78 = vector.load %arg6[%c0_32, %c0_33] : memref<8x1xf32, #tpu.memory_space<vmem>>, vector<8x1xf32>
    %79 = vector.broadcast %78 : vector<8x1xf32> to vector<8x256xf32>
    %80 = arith.mulf %77, %79 : vector<8x256xf32>
    %c0_34 = arith.constant 0 : index
    %c0_35 = arith.constant 0 : index
    %81 = vector.load %arg7[%c0_34, %c0_35] : memref<8x1xf32, #tpu.memory_space<vmem>>, vector<8x1xf32>
    %82 = vector.broadcast %81 : vector<8x1xf32> to vector<8x256xf32>
    %83 = arith.addf %80, %82 : vector<8x256xf32>
    %84 = arith.addf %83, %1 : vector<8x256xf32>
    %cst_36 = arith.constant 0.000000e+00 : f32
    %85 = vector.broadcast %cst_36 : f32 to vector<8x256xf32>
    %86 = arith.maximumf %84, %85 : vector<8x256xf32>
    %c0_37 = arith.constant 0 : index
    %c0_38 = arith.constant 0 : index
    %c0_39 = arith.constant 0 : index
    %87 = vector.load %arg10[%c0_37, %c0_38, %c0_39] : memref<1x8x256xf32, #tpu.memory_space<vmem>>, vector<1x8x256xf32>
    %88 = vector.shape_cast %87 : vector<1x8x256xf32> to vector<8x256xf32>
    %89 = vector.shape_cast %86 : vector<8x256xf32> to vector<1x8x256xf32>
    tpu.vector_store %arg10[%c0_37, %c0_38, %c0_39], %89 {strides = array<i32>} : memref<1x8x256xf32, #tpu.memory_space<vmem>>, vector<1x8x256xf32>,
    return
  }
  func.func @transform_0(%arg0: i32) -> (i32, i32, i32) {
    %c0_i32 = arith.constant 0 : i32
    %c0_i32_0 = arith.constant 0 : i32
    %c0_i32_1 = arith.constant 0 : i32
    return %arg0, %c0_i32, %c0_i32_0 : i32, i32, i32
  }
  func.func @transform_1(%arg0: i32) -> (i32, i32) {
    %c0_i32 = arith.constant 0 : i32
    %c0_i32_0 = arith.constant 0 : i32
    %c0_i32_1 = arith.constant 0 : i32
    return %c0_i32, %c0_i32_0 : i32, i32
  }
  func.func @transform_2(%arg0: i32) -> (i32, i32) {
    %c0_i32 = arith.constant 0 : i32
    %c0_i32_0 = arith.constant 0 : i32
    %c0_i32_1 = arith.constant 0 : i32
    return %c0_i32, %c0_i32_0 : i32, i32
  }
  func.func @transform_3(%arg0: i32) -> (i32, i32) {
    %c0_i32 = arith.constant 0 : i32
    %c0_i32_0 = arith.constant 0 : i32
    %c0_i32_1 = arith.constant 0 : i32
    return %c0_i32, %c0_i32_0 : i32, i32
  }
  func.func @transform_4(%arg0: i32) -> (i32, i32) {
    %c0_i32 = arith.constant 0 : i32
    %c0_i32_0 = arith.constant 0 : i32
    %c0_i32_1 = arith.constant 0 : i32
    return %c0_i32, %c0_i32_0 : i32, i32
  }
  func.func @transform_5(%arg0: i32) -> (i32, i32) {
    %c0_i32 = arith.constant 0 : i32
    %c0_i32_0 = arith.constant 0 : i32
    %c0_i32_1 = arith.constant 0 : i32
    return %c0_i32, %c0_i32_0 : i32, i32
  }
  func.func @transform_6(%arg0: i32) -> (i32, i32) {
    %c0_i32 = arith.constant 0 : i32
    %c0_i32_0 = arith.constant 0 : i32
    %c0_i32_1 = arith.constant 0 : i32
    return %c0_i32, %c0_i32_0 : i32, i32
  }
  func.func @transform_7(%arg0: i32) -> (i32, i32) {
    %c0_i32 = arith.constant 0 : i32
    %c0_i32_0 = arith.constant 0 : i32
    %c0_i32_1 = arith.constant 0 : i32
    return %c0_i32, %c0_i32_0 : i32, i32
  }
  func.func @transform_8(%arg0: i32) -> (i32, i32) {
    %c0_i32 = arith.constant 0 : i32
    %c0_i32_0 = arith.constant 0 : i32
    %c0_i32_1 = arith.constant 0 : i32
    return %c0_i32, %c0_i32_0 : i32, i32
  }
  func.func @transform_9(%arg0: i32) -> (i32, i32, i32) {
    %c0_i32 = arith.constant 0 : i32
    %c0_i32_0 = arith.constant 0 : i32
    %c0_i32_1 = arith.constant 0 : i32
    return %arg0, %c0_i32, %c0_i32_0 : i32, i32, i32
  }
}

</mosaic_0001>

<llo_original>
// kernel: basic_block_forward.1
$region0: #{basic_block_forward.1}
  #allocation0 [shape = 'u32[]', space=smem, size = 0x4, offset = 0x4, fixed_abs, tag = 'smem constant byte address 0x4 - core index']
  #allocation1 [shape = 'u32[144,128]{1,0:T(1,128)}', space=vmem, size = 0x12000, scoped, tag = 'internal scratch']
  %s0 = inlined_call_operand.vmem [shape: f32[2,8,256], index: 0, kind: input, shape index: {}]
  %s1 = inlined_call_operand.vmem [shape: f32[8,72], index: 1, kind: input, shape index: {}]
  %s2 = inlined_call_operand.vmem [shape: f32[8,1], index: 2, kind: input, shape index: {}]
  %s3 = inlined_call_operand.vmem [shape: f32[8,1], index: 3, kind: input, shape index: {}]
  %s4 = inlined_call_operand.vmem [shape: f32[8,72], index: 4, kind: input, shape index: {}]
  %s5 = inlined_call_operand.vmem [shape: f32[8,1], index: 5, kind: input, shape index: {}]
  %s6 = inlined_call_operand.vmem [shape: f32[8,1], index: 6, kind: input, shape index: {}]
  %s7 = inlined_call_operand.vmem [shape: f32[8,256], index: 7, kind: input, shape index: {}]
  %s8 = inlined_call_operand.vmem [shape: f32[8,256], index: 8, kind: input, shape index: {}]
  %s9 = inlined_call_operand.vmem [shape: f32[2,8,256], index: 9, kind: output, shape index: {}]
  %s10 = sld [smem:[#allocation0]]
  $region69: #{basic_block_forward.1} parent=0
    _
  %s12 = ssub.s32 1, %s10
  %s13 = scalar_select 0, %s12, %s10
  loop: start=0, step=1, limit=4
  $region2: #{basic_block_forward.1} parent=0 // loop_pre_header
    _
  $region3: #{basic_block_forward.1} parent=0 // loop_header
    %s15 = sphi 0, %s19
    %p16 = scmp.ge.s32.totalorder %s15, 4
    %s25 = sphi 0, %s27
    %s28 = sphi 0, %s25
    %s29 = sphi 0, %s28
    %s45 = sphi 0, %s29
    %s49 = sphi 0, %s49
    %s51 = sphi 0, %s49
    %s52 = sphi 0, %s51
    %s66 = sphi 0, %s52
    %s70 = sphi 0, %s70
    %s72 = sphi 0, %s70
    %s73 = sphi 0, %s72
    %s87 = sphi 0, %s73
    %s91 = sphi 0, %s91
    %s93 = sphi 0, %s91
    %s94 = sphi 0, %s93
    %s108 = sphi 0, %s94
    %s112 = sphi 0, %s112
    %s114 = sphi 0, %s112
    %s115 = sphi 0, %s114
    %s129 = sphi 0, %s115
    %s133 = sphi 0, %s133
    %s135 = sphi 0, %s133
    %s136 = sphi 0, %s135
    %s150 = sphi 0, %s136
    %s154 = sphi 0, %s154
    %s156 = sphi 0, %s154
    %s157 = sphi 0, %s156
    %s171 = sphi 0, %s157
    %s175 = sphi 0, %s175
    %s177 = sphi 0, %s175
    %s178 = sphi 0, %s177
    %s192 = sphi 0, %s178
    %s196 = sphi 0, %s196
    %s198 = sphi 0, %s196
    %s199 = sphi 0, %s198
    %s213 = sphi 0, %s199
    %s219 = sphi 0, %s221
    %s222 = sphi 0, %s219
    %s223 = sphi 0, %s222
    %s239 = sphi 0, %s223
  $region4: #{basic_block_forward.1} parent=0 // loop_header_branch
    %18 = sbr.rel (%p16) target = $region8
  $region5: #{basic_block_forward.1} parent=0 // loop_body
    %s20 = ssub.s32 %s15, 1
    %s21 = ssub.s32 %s15, 2
    %s22 = sadd.s32 %s15, 1
    %s23 = ssub.s32 %s15, %s22
    %p24 = scmp.eq.s32.totalorder %s23, 0
    %s26 = sadd.s32 %s25, 1
    %s27 = scalar_select %p24, %s25, %s26
    %p30 = pneg %p24
    %p31 = scmp.eq.s32.totalorder %s15, 1
    %p32 = por %p30, %p31
    %p33 = scmp.ne.s32.totalorder %s25, %s28
    %p34 = scmp.eq.s32.totalorder %s15, 0
    %p35 = por %p33, %p34
    %p36 = scmp.ne.s32.totalorder %s25, %s28
    %p37 = scmp.eq.s32.totalorder %s20, 1
    %p38 = por %p36, %p37
    %p39 = scmp.ne.s32.totalorder %s28, %s29
    %p40 = scmp.eq.s32.totalorder %s20, 0
    %p41 = por %p39, %p40
    %p42 = scmp.ne.s32.totalorder %s28, %s29
    %p43 = scmp.eq.s32.totalorder %s21, 1
    %p44 = por %p42, %p43
    %p46 = scmp.ne.s32.totalorder %s29, %s45
    %p47 = scmp.eq.s32.totalorder %s21, 0
    %p48 = por %p46, %p47
    %s50 = sadd.s32 %s49, 1
    %p53 = scmp.eq.s32.totalorder %s15, 1
    %p54 = scmp.ne.s32.totalorder %s49, %s51
    %p55 = scmp.eq.s32.totalorder %s15, 0
    %p56 = por %p54, %p55
    %p57 = scmp.ne.s32.totalorder %s49, %s51
    %p58 = scmp.eq.s32.totalorder %s20, 1
    %p59 = por %p57, %p58
    %p60 = scmp.ne.s32.totalorder %s51, %s52
    %p61 = scmp.eq.s32.totalorder %s20, 0
    %p62 = por %p60, %p61
    %p63 = scmp.ne.s32.totalorder %s51, %s52
    %p64 = scmp.eq.s32.totalorder %s21, 1
    %p65 = por %p63, %p64
    %p67 = scmp.ne.s32.totalorder %s52, %s66
    %p68 = scmp.eq.s32.totalorder %s21, 0
    %p69 = por %p67, %p68
    %s71 = sadd.s32 %s70, 1
    %p74 = scmp.eq.s32.totalorder %s15, 1
    %p75 = scmp.ne.s32.totalorder %s70, %s72
    %p76 = scmp.eq.s32.totalorder %s15, 0
    %p77 = por %p75, %p76
    %p78 = scmp.ne.s32.totalorder %s70, %s72
    %p79 = scmp.eq.s32.totalorder %s20, 1
    %p80 = por %p78, %p79
    %p81 = scmp.ne.s32.totalorder %s72, %s73
    %p82 = scmp.eq.s32.totalorder %s20, 0
    %p83 = por %p81, %p82
    %p84 = scmp.ne.s32.totalorder %s72, %s73
    %p85 = scmp.eq.s32.totalorder %s21, 1
    %p86 = por %p84, %p85
    %p88 = scmp.ne.s32.totalorder %s73, %s87
    %p89 = scmp.eq.s32.totalorder %s21, 0
    %p90 = por %p88, %p89
    %s92 = sadd.s32 %s91, 1
    %p95 = scmp.eq.s32.totalorder %s15, 1
    %p96 = scmp.ne.s32.totalorder %s91, %s93
    %p97 = scmp.eq.s32.totalorder %s15, 0
    %p98 = por %p96, %p97
    %p99 = scmp.ne.s32.totalorder %s91, %s93
    %p100 = scmp.eq.s32.totalorder %s20, 1
    %p101 = por %p99, %p100
    %p102 = scmp.ne.s32.totalorder %s93, %s94
    %p103 = scmp.eq.s32.totalorder %s20, 0
    %p104 = por %p102, %p103
    %p105 = scmp.ne.s32.totalorder %s93, %s94
    %p106 = scmp.eq.s32.totalorder %s21, 1
    %p107 = por %p105, %p106
    %p109 = scmp.ne.s32.totalorder %s94, %s108
    %p110 = scmp.eq.s32.totalorder %s21, 0
    %p111 = por %p109, %p110
    %s113 = sadd.s32 %s112, 1
    %p116 = scmp.eq.s32.totalorder %s15, 1
    %p117 = scmp.ne.s32.totalorder %s112, %s114
    %p118 = scmp.eq.s32.totalorder %s15, 0
    %p119 = por %p117, %p118
    %p120 = scmp.ne.s32.totalorder %s112, %s114
    %p121 = scmp.eq.s32.totalorder %s20, 1
    %p122 = por %p120, %p121
    %p123 = scmp.ne.s32.totalorder %s114, %s115
    %p124 = scmp.eq.s32.totalorder %s20, 0
    %p125 = por %p123, %p124
    %p126 = scmp.ne.s32.totalorder %s114, %s115
    %p127 = scmp.eq.s32.totalorder %s21, 1
    %p128 = por %p126, %p127
    %p130 = scmp.ne.s32.totalorder %s115, %s129
    %p131 = scmp.eq.s32.totalorder %s21, 0
    %p132 = por %p130, %p131
    %s134 = sadd.s32 %s133, 1
    %p137 = scmp.eq.s32.totalorder %s15, 1
    %p138 = scmp.ne.s32.totalorder %s133, %s135
    %p139 = scmp.eq.s32.totalorder %s15, 0
    %p140 = por %p138, %p139
    %p141 = scmp.ne.s32.totalorder %s133, %s135
    %p142 = scmp.eq.s32.totalorder %s20, 1
    %p143 = por %p141, %p142
    %p144 = scmp.ne.s32.totalorder %s135, %s136
    %p145 = scmp.eq.s32.totalorder %s20, 0
    %p146 = por %p144, %p145
    %p147 = scmp.ne.s32.totalorder %s135, %s136
    %p148 = scmp.eq.s32.totalorder %s21, 1
    %p149 = por %p147, %p148
    %p151 = scmp.ne.s32.totalorder %s136, %s150
    %p152 = scmp.eq.s32.totalorder %s21, 0
    %p153 = por %p151, %p152
    %s155 = sadd.s32 %s154, 1
    %p158 = scmp.eq.s32.totalorder %s15, 1
    %p159 = scmp.ne.s32.totalorder %s154, %s156
    %p160 = scmp.eq.s32.totalorder %s15, 0
    %p161 = por %p159, %p160
    %p162 = scmp.ne.s32.totalorder %s154, %s156
    %p163 = scmp.eq.s32.totalorder %s20, 1
    %p164 = por %p162, %p163
    %p165 = scmp.ne.s32.totalorder %s156, %s157
    %p166 = scmp.eq.s32.totalorder %s20, 0
    %p167 = por %p165, %p166
    %p168 = scmp.ne.s32.totalorder %s156, %s157
    %p169 = scmp.eq.s32.totalorder %s21, 1
    %p170 = por %p168, %p169
    %p172 = scmp.ne.s32.totalorder %s157, %s171
    %p173 = scmp.eq.s32.totalorder %s21, 0
    %p174 = por %p172, %p173
    %s176 = sadd.s32 %s175, 1
    %p179 = scmp.eq.s32.totalorder %s15, 1
    %p180 = scmp.ne.s32.totalorder %s175, %s177
    %p181 = scmp.eq.s32.totalorder %s15, 0
    %p182 = por %p180, %p181
    %p183 = scmp.ne.s32.totalorder %s175, %s177
    %p184 = scmp.eq.s32.totalorder %s20, 1
    %p185 = por %p183, %p184
    %p186 = scmp.ne.s32.totalorder %s177, %s178
    %p187 = scmp.eq.s32.totalorder %s20, 0
    %p188 = por %p186, %p187
    %p189 = scmp.ne.s32.totalorder %s177, %s178
    %p190 = scmp.eq.s32.totalorder %s21, 1
    %p191 = por %p189, %p190
    %p193 = scmp.ne.s32.totalorder %s178, %s192
    %p194 = scmp.eq.s32.totalorder %s21, 0
    %p195 = por %p193, %p194
    %s197 = sadd.s32 %s196, 1
    %p200 = scmp.eq.s32.totalorder %s15, 1
    %p201 = scmp.ne.s32.totalorder %s196, %s198
    %p202 = scmp.eq.s32.totalorder %s15, 0
    %p203 = por %p201, %p202
    %p204 = scmp.ne.s32.totalorder %s196, %s198
    %p205 = scmp.eq.s32.totalorder %s20, 1
    %p206 = por %p204, %p205
    %p207 = scmp.ne.s32.totalorder %s198, %s199
    %p208 = scmp.eq.s32.totalorder %s20, 0
    %p209 = por %p207, %p208
    %p210 = scmp.ne.s32.totalorder %s198, %s199
    %p211 = scmp.eq.s32.totalorder %s21, 1
    %p212 = por %p210, %p211
    %p214 = scmp.ne.s32.totalorder %s199, %s213
    %p215 = scmp.eq.s32.totalorder %s21, 0
    %p216 = por %p214, %p215
    %s217 = ssub.s32 %s15, %s22
    %p218 = scmp.eq.s32.totalorder %s217, 0
    %s220 = sadd.s32 %s219, 1
    %s221 = scalar_select %p218, %s219, %s220
    %p224 = pneg %p218
    %p225 = scmp.eq.s32.totalorder %s15, 1
    %p226 = por %p224, %p225
    %p227 = scmp.ne.s32.totalorder %s219, %s222
    %p228 = scmp.eq.s32.totalorder %s15, 0
    %p229 = por %p227, %p228
    %p230 = scmp.ne.s32.totalorder %s219, %s222
    %p231 = scmp.eq.s32.totalorder %s20, 1
    %p232 = por %p230, %p231
    %p233 = scmp.ne.s32.totalorder %s222, %s223
    %p234 = scmp.eq.s32.totalorder %s20, 0
    %p235 = por %p233, %p234
    %p236 = scmp.ne.s32.totalorder %s222, %s223
    %p237 = scmp.eq.s32.totalorder %s21, 1
    %p238 = por %p236, %p237
    %p240 = scmp.ne.s32.totalorder %s223, %s239
    %p241 = scmp.eq.s32.totalorder %s21, 0
    %p242 = por %p240, %p241
    %p243 = scmp.le.s32.totalorder 1, %s15
    %p244 = scmp.lt.s32.totalorder %s15, 3
    %p245 = pnand %p243, %p244
    %p246 = pneg %p245
    // Predicated region
    $region9: #{basic_block_forward.1} parent=5 // pred_check
      _
    $region10: #{basic_block_forward.1} parent=5 // pred_check_branch
      %248 = sbr.rel (%p245) target = $region12
    $region11: #{basic_block_forward.1} parent=5 // pred_region
      %s249 = ssub.s32 %s15, 1
      // Predicated region
      $region13: #{basic_block_forward.1} parent=11 // pred_check
        %p250 = pneg %p62
      $region14: #{basic_block_forward.1} parent=11 // pred_check_branch
        %252 = sbr.rel (%p250) target = $region16
      $region15: #{basic_block_forward.1} parent=11 // pred_region
        _
      $region16: #{basic_block_forward.1} parent=11 // pred_fallthru
        _
      // Predicated region
      $region17: #{basic_block_forward.1} parent=11 // pred_check
        %p253 = pneg %p83
      $region18: #{basic_block_forward.1} parent=11 // pred_check_branch
        %255 = sbr.rel (%p253) target = $region20
      $region19: #{basic_block_forward.1} parent=11 // pred_region
        _
      $region20: #{basic_block_forward.1} parent=11 // pred_fallthru
        _
      // Predicated region
      $region21: #{basic_block_forward.1} parent=11 // pred_check
        %p256 = pneg %p104
      $region22: #{basic_block_forward.1} parent=11 // pred_check_branch
        %258 = sbr.rel (%p256) target = $region24
      $region23: #{basic_block_forward.1} parent=11 // pred_region
        _
      $region24: #{basic_block_forward.1} parent=11 // pred_fallthru
        _
      // Predicated region
      $region25: #{basic_block_forward.1} parent=11 // pred_check
        %p259 = pneg %p125
      $region26: #{basic_block_forward.1} parent=11 // pred_check_branch
        %261 = sbr.rel (%p259) target = $region28
      $region27: #{basic_block_forward.1} parent=11 // pred_region
        _
      $region28: #{basic_block_forward.1} parent=11 // pred_fallthru
        _
      // Predicated region
      $region29: #{basic_block_forward.1} parent=11 // pred_check
        %p262 = pneg %p146
      $region30: #{basic_block_forward.1} parent=11 // pred_check_branch
        %264 = sbr.rel (%p262) target = $region32
      $region31: #{basic_block_forward.1} parent=11 // pred_region
        _
      $region32: #{basic_block_forward.1} parent=11 // pred_fallthru
        _
      // Predicated region
      $region33: #{basic_block_forward.1} parent=11 // pred_check
        %p265 = pneg %p167
      $region34: #{basic_block_forward.1} parent=11 // pred_check_branch
        %267 = sbr.rel (%p265) target = $region36
      $region35: #{basic_block_forward.1} parent=11 // pred_region
        _
      $region36: #{basic_block_forward.1} parent=11 // pred_fallthru
        _
      // Predicated region
      $region37: #{basic_block_forward.1} parent=11 // pred_check
        %p268 = pneg %p188
      $region38: #{basic_block_forward.1} parent=11 // pred_check_branch
        %270 = sbr.rel (%p268) target = $region40
      $region39: #{basic_block_forward.1} parent=11 // pred_region
        _
      $region40: #{basic_block_forward.1} parent=11 // pred_fallthru
        _
      // Predicated region
      $region41: #{basic_block_forward.1} parent=11 // pred_check
        %p271 = pneg %p209
      $region42: #{basic_block_forward.1} parent=11 // pred_check_branch
        %273 = sbr.rel (%p271) target = $region44
      $region43: #{basic_block_forward.1} parent=11 // pred_region
        _
      $region44: #{basic_block_forward.1} parent=11 // pred_fallthru
        _
    $region12: #{basic_block_forward.1} parent=5 // pred_fallthru
      _
    %p274 = scmp.lt.s32.totalorder %s15, 2
    // Predicated region
    $region45: #{basic_block_forward.1} parent=5 // pred_check
      %p275 = pneg %p274
    $region46: #{basic_block_forward.1} parent=5 // pred_check_branch
      %277 = sbr.rel (%p275) target = $region48
    $region47: #{basic_block_forward.1} parent=5 // pred_region
      // Predicated region
      $region49: #{basic_block_forward.1} parent=47 // pred_check
        %p278 = pneg %p35
      $region50: #{basic_block_forward.1} parent=47 // pred_check_branch
        %280 = sbr.rel (%p278) target = $region52
      $region51: #{basic_block_forward.1} parent=47 // pred_region
        %p281 = scmp.lt.s32.totalorder %s15, 1
        %s282 = scalar_select %p281, %s15, 1
        %s283 = smul.addr %s282, 2
        %s284 = smul.addr %s283, 8
        %s285 = scalar_lea.vmem %s0, %s284
      $region52: #{basic_block_forward.1} parent=47 // pred_fallthru
        _
    $region48: #{basic_block_forward.1} parent=5 // pred_fallthru
      _
    %p286 = scmp.le.s32.totalorder 1, %s15
    %p287 = scmp.lt.s32.totalorder %s15, 3
    %p288 = pnand %p286, %p287
    %p289 = pneg %p288
    // Predicated region
    $region53: #{basic_block_forward.1} parent=5 // pred_check
      _
    $region54: #{basic_block_forward.1} parent=5 // pred_check_branch
      %291 = sbr.rel (%p288) target = $region56
    $region55: #{basic_block_forward.1} parent=5 // pred_region
      %s292 = ssub.s32 %s15, 1
      %p293 = scmp.lt.s32.totalorder %s20, 1
      %s294 = scalar_select %p293, %s20, 1
      %s295 = smul.addr %s294, 2
      %s296 = smul.addr %s295, 8
      %s297 = scalar_lea.vmem %s0, %s296
      %p298 = pneg %p41
      %p299 = pneg %p38
      %p300 = pneg %p62
      %p301 = pneg %p59
      %p302 = pneg %p83
      %p303 = pneg %p80
      %p304 = pneg %p104
      %p305 = pneg %p101
      %p306 = pneg %p125
      %p307 = pneg %p122
      %p308 = pneg %p146
      %p309 = pneg %p143
      %p310 = pneg %p167
      %p311 = pneg %p164
      %p312 = pneg %p188
      %p313 = pneg %p185
      %p314 = pneg %p209
      %p315 = pneg %p206
      %p316 = pneg %p235
      %p317 = pneg %p232
      %p318 = scmp.lt.s32.totalorder %s20, 1
      %s319 = scalar_select %p318, %s20, 1
      %s320 = smul.addr %s319, 2
      %s321 = smul.addr %s320, 8
      %s322 = scalar_lea.vmem %s9, %s321
      %p323 = scmp.lt.s32.totalorder %s20, 1
      %s324 = scalar_select %p323, %s20, 1
      %s325 = smul.addr %s324, 2
      %s326 = smul.addr %s325, 8
      %s327 = scalar_lea.vmem %s0, %s326
      %p328 = scmp.lt.s32.totalorder %s20, 1
      %s329 = scalar_select %p328, %s20, 1
      %s330 = smul.addr %s329, 2
      %s331 = smul.addr %s330, 8
      %s332 = scalar_lea.vmem %s9, %s331
      %v333 = vld [vmem:[%s327] sm:$0xff]
      %v334 = vld [vmem:[%s327 + $0x8] sm:$0xff]
      %v335 = vld [vmem:[%s7] sm:$0xff]
      %v336 = vld [vmem:[%s7 + $0x8] sm:$0xff]
      %v337 = vld [vmem:[%s8] sm:$0xff]
      %v338 = vld [vmem:[%s8 + $0x8] sm:$0xff]
      %341 = vrot.lane.b32.xlu0 %v333, 17
      %v342 = vpop.permute.xlu0 %341
      %343 = vrot.lane.b32.xlu0 %v334, 17
      %v344 = vpop.permute.xlu0 %343
      %vm345 = vcmask 138240
      %v346 = vsel %vm345, %v342, %v344
      %v349 = vsel %vm345, 0.0, %v342
      %v350 = vmul.f32 %v349, %v335
      %v351 = vmul.f32 %v346, %v336
      %352 = vrot.lane.b32.xlu0 %v333, 16
      %v353 = vpop.permute.xlu0 %352
      %354 = vrot.lane.b32.xlu0 %v334, 16
      %v355 = vpop.permute.xlu0 %354
      %vm356 = vcmask 130048
      %v357 = vsel %vm356, %v353, %v355
      %v360 = vsel %vm356, 0.0, %v353
      %361 = vrot.lane.b32.xlu0 %v333, 15
      %v362 = vpop.permute.xlu0 %361
      %363 = vrot.lane.b32.xlu0 %v334, 15
      %v364 = vpop.permute.xlu0 %363
      %vm365 = vcmask 121856
      %v366 = vsel %vm365, %v362, %v364
      %v369 = vsel %vm365, 0.0, %v362
      %v370 = vmul.f32 %v369, %v337
      %v371 = vmul.f32 %v366, %v338
      %372 = vrot.lane.b32.xlu0 %v333, 1
      %v373 = vpop.permute.xlu0 %372
      %374 = vrot.lane.b32.xlu0 %v334, 1
      %v375 = vpop.permute.xlu0 %374
      %vm376 = vcmask 7168
      %v377 = vsel %vm376, %v373, %v375
      %v380 = vsel %vm376, 0.0, %v373
      %v381 = vmul.f32 %v380, %v335
      %v382 = vmul.f32 %v377, %v336
      %383 = vrot.lane.b32.xlu0 %v333, 127
      %v384 = vpop.permute.xlu0 %383
      %385 = vrot.lane.b32.xlu0 %v334, 127
      %v386 = vpop.permute.xlu0 %385
      %vm387 = vcmask 1039360
      %v388 = vsel %vm387, %v384, %v386
      %v391 = vsel %vm387, %v386, 0.0
      %v392 = vmul.f32 %v388, %v337
      %v393 = vmul.f32 %v391, %v338
      %394 = vrot.lane.b32.xlu0 %v333, 113
      %v395 = vpop.permute.xlu0 %394
      %396 = vrot.lane.b32.xlu0 %v334, 113
      %v397 = vpop.permute.xlu0 %396
      %vm398 = vcmask 924672
      %v399 = vsel %vm398, %v395, %v397
      %v402 = vsel %vm398, %v397, 0.0
      %v403 = vmul.f32 %v399, %v335
      %v404 = vmul.f32 %v402, %v336
      %405 = vrot.lane.b32.xlu0 %v333, 112
      %v406 = vpop.permute.xlu0 %405
      %407 = vrot.lane.b32.xlu0 %v334, 112
      %v408 = vpop.permute.xlu0 %407
      %vm409 = vcmask 916480
      %v410 = vsel %vm409, %v406, %v408
      %v413 = vsel %vm409, %v408, 0.0
      %414 = vrot.lane.b32.xlu0 %v333, 111
      %v415 = vpop.permute.xlu0 %414
      %416 = vrot.lane.b32.xlu0 %v334, 111
      %v417 = vpop.permute.xlu0 %416
      %vm418 = vcmask 908288
      %v419 = vsel %vm418, %v415, %v417
      %v422 = vsel %vm418, %v417, 0.0
      %v423 = vmul.f32 %v419, %v337
      %v424 = vmul.f32 %v422, %v338
      %v425 = vld [vmem:[%s1] sm:$0xff]
      %vm426 = vcmask 588800
      %v428 = vsel %vm426, %v425, 0
      %430 = vmatprep.subr.mxu0 %v351
      %431 = vmatpush1.msra.mxu0 %v350
      %432 = vmatprep.subr.mxu0 %v357
      %433 = vmatpush1.msra.mxu0 %v360
      %434 = vmatprep.subr.mxu0 %v371
      %435 = vmatpush1.msra.mxu0 %v370
      %436 = vmatprep.subr.mxu0 %v382
      %437 = vmatpush1.msra.mxu0 %v381
      %438 = vmatprep.subr.mxu0 %v334
      %439 = vmatpush1.msra.mxu0 %v333
      %440 = vmatprep.subr.mxu0 %v393
      %441 = vmatpush1.msra.mxu0 %v392
      %442 = vmatprep.subr.mxu0 %v404
      %443 = vmatpush1.msra.mxu0 %v403
      %444 = vmatprep.subr.mxu0 %v413
      %445 = vmatpush1.msra.mxu0 %v410
      %446 = vmatprep.subr.mxu0 %v424
      %447 = vmatpush1.msra.mxu0 %v423
      %448 = vmatprep.subr.mxu0 0.0
      %449 = vmatpush1.msra.mxu0 0.0
      %450 = vmatprep.subr.mxu0 0.0
      %451 = vmatpush1.msra.mxu0 0.0
      %452 = vmatprep.subr.mxu0 0.0
      %453 = vmatpush1.msra.mxu0 0.0
      %454 = vmatprep.subr.mxu0 0.0
      %455 = vmatpush1.msra.mxu0 0.0
      %456 = vmatprep.subr.mxu0 0.0
      %457 = vmatpush1.msra.mxu0 0.0
      %458 = vmatprep.subr.mxu0 0.0
      %459 = vmatpush1.msra.mxu0 0.0
      %460 = vmatprep.subr.mxu0 0.0
      %461 = vmatpush1.msra.mxu0 0.0
      %462 = vmatprep.subr.mxu0 0.0
      %463 = vmatpush1.msra.mxu0 0.0
      %464 = vmatprep.subr.mxu0 0.0
      %465 = vmatpush1.msra.mxu0 0.0
      %466 = vmatprep.subr.mxu0 0.0
      %467 = vmatpush1.msra.mxu0 0.0
      %468 = vmatprep.subr.mxu0 0.0
      %469 = vmatpush1.msra.mxu0 0.0
      %470 = vmatprep.subr.mxu0 0.0
      %471 = vmatpush1.msra.mxu0 0.0
      %472 = vmatprep.subr.mxu0 0.0
      %473 = vmatpush1.msra.mxu0 0.0
      %474 = vmatprep.subr.mxu0 0.0
      %475 = vmatpush1.msra.mxu0 0.0
      %476 = vmatprep.subr.mxu0 0.0
      %477 = vmatpush1.msra.mxu0 0.0
      %478 = vmatprep.subr.mxu0 0.0
      %479 = vmatpush1.msra.mxu0 0.0
      %480 = vmatprep.subr.mxu0 0.0
      %481 = vmatpush1.msra.mxu0 0.0
      %482 = vmatprep.subr.mxu0 0.0
      %483 = vmatpush1.msra.mxu0 0.0
      %484 = vmatprep.subr.mxu0 0.0
      %485 = vmatpush1.msra.mxu0 0.0
      %486 = vmatprep.subr.mxu0 0.0
      %487 = vmatpush1.msra.mxu0 0.0
      %488 = vmatprep.subr.mxu0 0.0
      %489 = vmatpush1.msra.mxu0 0.0
      %490 = vmatprep.subr.mxu0 0.0
      %491 = vmatpush1.msra.mxu0 0.0
      %492 = vmatprep.subr.mxu0 0.0
      %493 = vmatpush1.msra.mxu0 0.0
      %494 = vmatprep.mubr.f32.mxu0 0.0
      %495 = vmatmul.mubr.f32.gmra.mrb[0].mxu0 %v428
      %v496 = vpop.f32.mrb[0].mxu0
      %v497 = vadd.f32 0.0, %v496
      %v498 = vpop.f32.mrb[0].mxu0
      %v499 = vadd.f32 0.0, %v498
      %500 = vdwg.mxu0
      %v501 = vld [vmem:[%s2] sm:$0xff]
      %503 = vset.pattern.permute.xlu0 0
      %504 = vperm.xlu0 %503, %v501
      %v505 = vpop.permute.xlu0 %504
      %v507 = vmul.f32 %v497, %v505
      %v508 = vmul.f32 %v499, %v505
      %v509 = vld [vmem:[%s3] sm:$0xff]
      %511 = vset.pattern.permute.xlu0 0
      %512 = vperm.xlu0 %511, %v509
      %v513 = vpop.permute.xlu0 %512
      %v515 = vadd.f32 %v507, %v513
      %v516 = vadd.f32 %v508, %v513
      %v517 = vmax.f32 %v515, 0.0
      %v518 = vmax.f32 %v516, 0.0
      %521 = vrot.lane.b32.xlu0 %v517, 17
      %v522 = vpop.permute.xlu0 %521
      %523 = vrot.lane.b32.xlu0 %v518, 17
      %v524 = vpop.permute.xlu0 %523
      %v525 = vsel %vm345, %v522, %v524
      %v528 = vsel %vm345, 0.0, %v522
      %v529 = vmul.f32 %v528, %v335
      %v530 = vmul.f32 %v525, %v336
      %531 = vrot.lane.b32.xlu0 %v517, 16
      %v532 = vpop.permute.xlu0 %531
      %533 = vrot.lane.b32.xlu0 %v518, 16
      %v534 = vpop.permute.xlu0 %533
      %v535 = vsel %vm356, %v532, %v534
      %v538 = vsel %vm356, 0.0, %v532
      %539 = vrot.lane.b32.xlu0 %v517, 15
      %v540 = vpop.permute.xlu0 %539
      %541 = vrot.lane.b32.xlu0 %v518, 15
      %v542 = vpop.permute.xlu0 %541
      %v543 = vsel %vm365, %v540, %v542
      %v546 = vsel %vm365, 0.0, %v540
      %v547 = vmul.f32 %v546, %v337
      %v548 = vmul.f32 %v543, %v338
      %549 = vrot.lane.b32.xlu0 %v517, 1
      %v550 = vpop.permute.xlu0 %549
      %551 = vrot.lane.b32.xlu0 %v518, 1
      %v552 = vpop.permute.xlu0 %551
      %v553 = vsel %vm376, %v550, %v552
      %v556 = vsel %vm376, 0.0, %v550
      %v557 = vmul.f32 %v556, %v335
      %v558 = vmul.f32 %v553, %v336
      %559 = vrot.lane.b32.xlu0 %v517, 127
      %v560 = vpop.permute.xlu0 %559
      %561 = vrot.lane.b32.xlu0 %v518, 127
      %v562 = vpop.permute.xlu0 %561
      %v563 = vsel %vm387, %v560, %v562
      %v566 = vsel %vm387, %v562, 0.0
      %v567 = vmul.f32 %v563, %v337
      %v568 = vmul.f32 %v566, %v338
      %569 = vrot.lane.b32.xlu0 %v517, 113
      %v570 = vpop.permute.xlu0 %569
      %571 = vrot.lane.b32.xlu0 %v518, 113
      %v572 = vpop.permute.xlu0 %571
      %v573 = vsel %vm398, %v570, %v572
      %v576 = vsel %vm398, %v572, 0.0
      %v577 = vmul.f32 %v573, %v335
      %v578 = vmul.f32 %v576, %v336
      %579 = vrot.lane.b32.xlu0 %v517, 112
      %v580 = vpop.permute.xlu0 %579
      %581 = vrot.lane.b32.xlu0 %v518, 112
      %v582 = vpop.permute.xlu0 %581
      %v583 = vsel %vm409, %v580, %v582
      %v586 = vsel %vm409, %v582, 0.0
      %587 = vrot.lane.b32.xlu0 %v517, 111
      %v588 = vpop.permute.xlu0 %587
      %589 = vrot.lane.b32.xlu0 %v518, 111
      %v590 = vpop.permute.xlu0 %589
      %v591 = vsel %vm418, %v588, %v590
      %v594 = vsel %vm418, %v590, 0.0
      %v595 = vmul.f32 %v591, %v337
      %v596 = vmul.f32 %v594, %v338
      %v597 = vld [vmem:[%s4] sm:$0xff]
      %v599 = vsel %vm426, %v597, 0
      %601 = vmatprep.subr.mxu0 %v530
      %602 = vmatpush1.msra.mxu0 %v529
      %603 = vmatprep.subr.mxu0 %v535
      %604 = vmatpush1.msra.mxu0 %v538
      %605 = vmatprep.subr.mxu0 %v548
      %606 = vmatpush1.msra.mxu0 %v547
      %607 = vmatprep.subr.mxu0 %v558
      %608 = vmatpush1.msra.mxu0 %v557
      %609 = vmatprep.subr.mxu0 %v518
      %610 = vmatpush1.msra.mxu0 %v517
      %611 = vmatprep.subr.mxu0 %v568
      %612 = vmatpush1.msra.mxu0 %v567
      %613 = vmatprep.subr.mxu0 %v578
      %614 = vmatpush1.msra.mxu0 %v577
      %615 = vmatprep.subr.mxu0 %v586
      %616 = vmatpush1.msra.mxu0 %v583
      %617 = vmatprep.subr.mxu0 %v596
      %618 = vmatpush1.msra.mxu0 %v595
      %619 = vmatprep.subr.mxu0 0.0
      %620 = vmatpush1.msra.mxu0 0.0
      %621 = vmatprep.subr.mxu0 0.0
      %622 = vmatpush1.msra.mxu0 0.0
      %623 = vmatprep.subr.mxu0 0.0
      %624 = vmatpush1.msra.mxu0 0.0
      %625 = vmatprep.subr.mxu0 0.0
      %626 = vmatpush1.msra.mxu0 0.0
      %627 = vmatprep.subr.mxu0 0.0
      %628 = vmatpush1.msra.mxu0 0.0
      %629 = vmatprep.subr.mxu0 0.0
      %630 = vmatpush1.msra.mxu0 0.0
      %631 = vmatprep.subr.mxu0 0.0
      %632 = vmatpush1.msra.mxu0 0.0
      %633 = vmatprep.subr.mxu0 0.0
      %634 = vmatpush1.msra.mxu0 0.0
      %635 = vmatprep.subr.mxu0 0.0
      %636 = vmatpush1.msra.mxu0 0.0
      %637 = vmatprep.subr.mxu0 0.0
      %638 = vmatpush1.msra.mxu0 0.0
      %639 = vmatprep.subr.mxu0 0.0
      %640 = vmatpush1.msra.mxu0 0.0
      %641 = vmatprep.subr.mxu0 0.0
      %642 = vmatpush1.msra.mxu0 0.0
      %643 = vmatprep.subr.mxu0 0.0
      %644 = vmatpush1.msra.mxu0 0.0
      %645 = vmatprep.subr.mxu0 0.0
      %646 = vmatpush1.msra.mxu0 0.0
      %647 = vmatprep.subr.mxu0 0.0
      %648 = vmatpush1.msra.mxu0 0.0
      %649 = vmatprep.subr.mxu0 0.0
      %650 = vmatpush1.msra.mxu0 0.0
      %651 = vmatprep.subr.mxu0 0.0
      %652 = vmatpush1.msra.mxu0 0.0
      %653 = vmatprep.subr.mxu0 0.0
      %654 = vmatpush1.msra.mxu0 0.0
      %655 = vmatprep.subr.mxu0 0.0
      %656 = vmatpush1.msra.mxu0 0.0
      %657 = vmatprep.subr.mxu0 0.0
      %658 = vmatpush1.msra.mxu0 0.0
      %659 = vmatprep.subr.mxu0 0.0
      %660 = vmatpush1.msra.mxu0 0.0
      %661 = vmatprep.subr.mxu0 0.0
      %662 = vmatpush1.msra.mxu0 0.0
      %663 = vmatprep.subr.mxu0 0.0
      %664 = vmatpush1.msra.mxu0 0.0
      %665 = vmatprep.mubr.f32.mxu0 0.0
      %666 = vmatmul.mubr.f32.gmra.mrb[0].mxu0 %v599
      %v667 = vpop.f32.mrb[0].mxu0
      %v668 = vadd.f32 0.0, %v667
      %v669 = vpop.f32.mrb[0].mxu0
      %v670 = vadd.f32 0.0, %v669
      %671 = vdwg.mxu0
      %v672 = vld [vmem:[%s5] sm:$0xff]
      %674 = vset.pattern.permute.xlu0 0
      %675 = vperm.xlu0 %674, %v672
      %v676 = vpop.permute.xlu0 %675
      %v678 = vmul.f32 %v668, %v676
      %v679 = vmul.f32 %v670, %v676
      %v680 = vld [vmem:[%s6] sm:$0xff]
      %682 = vset.pattern.permute.xlu0 0
      %683 = vperm.xlu0 %682, %v680
      %v684 = vpop.permute.xlu0 %683
      %v686 = vadd.f32 %v678, %v684
      %v687 = vadd.f32 %v679, %v684
      %v688 = vadd.f32 %v686, %v333
      %v689 = vadd.f32 %v687, %v334
      %v690 = vmax.f32 %v688, 0.0
      %v691 = vmax.f32 %v689, 0.0
      %692 = vst [vmem:[%s332] sm:$0xff] %v690
      %693 = vst [vmem:[%s332 + $0x8] sm:$0xff] %v691
      %p694 = scmp.lt.s32.totalorder %s20, 1
      %s695 = scalar_select %p694, %s20, 1
      %s696 = smul.addr %s695, 2
      %s697 = smul.addr %s696, 8
      %s698 = scalar_lea.vmem %s9, %s697
      // Predicated region
      $region57: #{basic_block_forward.1} parent=55 // pred_check
        %p699 = pneg %p232
      $region58: #{basic_block_forward.1} parent=55 // pred_check_branch
        %701 = sbr.rel (%p699) target = $region60
      $region59: #{basic_block_forward.1} parent=55 // pred_region
        _
      $region60: #{basic_block_forward.1} parent=55 // pred_fallthru
        _
    $region56: #{basic_block_forward.1} parent=5 // pred_fallthru
      _
    %p702 = scmp.le.s32.totalorder 2, %s15
    // Predicated region
    $region61: #{basic_block_forward.1} parent=5 // pred_check
      %p703 = pneg %p702
    $region62: #{basic_block_forward.1} parent=5 // pred_check_branch
      %705 = sbr.rel (%p703) target = $region64
    $region63: #{basic_block_forward.1} parent=5 // pred_region
      %s706 = ssub.s32 %s15, 2
      // Predicated region
      $region65: #{basic_block_forward.1} parent=63 // pred_check
        %p707 = pneg %p238
      $region66: #{basic_block_forward.1} parent=63 // pred_check_branch
        %709 = sbr.rel (%p707) target = $region68
      $region67: #{basic_block_forward.1} parent=63 // pred_region
        %p710 = scmp.lt.s32.totalorder %s21, 1
        %s711 = scalar_select %p710, %s21, 1
        %s712 = smul.addr %s711, 2
        %s713 = smul.addr %s712, 8
        %s714 = scalar_lea.vmem %s9, %s713
      $region68: #{basic_block_forward.1} parent=63 // pred_fallthru
        _
    $region64: #{basic_block_forward.1} parent=5 // pred_fallthru
      _
  $region6: #{basic_block_forward.1} parent=0 // loop_footer
    %s19 = sadd.s32 1, %s15
  $region7: #{basic_block_forward.1} parent=0 // loop_footer_branch
    %14 = sbr.rel target = $region3
  $region8: #{basic_block_forward.1} parent=0 // loop_exit
    _

</llo_original>
